<compile_context>
chip_gen: v6e
topology: v6e:2x2x1
jax: 0.10.0
libtpu: 0.0.40
codegen_flags: <defaults>
</compile_context>

<pallas_src>
import jax
import jax.numpy as jnp
from jax.experimental import pallas as pl
from jax.experimental.pallas import tpu as pltpu


def _round_up(x, m):
    return ((x + m - 1) // m) * m


def _vmem_limit_bytes():
    """Generation-aware VMEM limit: ~75% of physical VMEM, capped at 96 MiB."""
    try:
        cap = int(pltpu.get_tpu_info().vmem_capacity_bytes)
    except Exception:
        cap = 64 * 1024 * 1024  # conservative (v7x per-TC) fallback
    return max(32 * 1024 * 1024, min((cap * 3) // 4, 96 * 1024 * 1024))


def _plan_budget(vmem_limit):
    # Conservative budget used for tile planning (safe even on v7x's 64 MiB VMEM).
    return max(24 * 1024 * 1024, min(vmem_limit - 8 * 1024 * 1024, 48 * 1024 * 1024))


def _divisor_tile(n_pad, cap):
    """Largest multiple of 128 that divides n_pad and is <= cap (floor 128)."""
    cap = max(128, min(cap, n_pad))
    best = 128
    for t in range(128, cap + 1, 128):
        if n_pad % t == 0:
            best = t
    return best


# ----------------------------- Pallas kernels ---------------------------------------


def _feat_transform_kernel(x_ref, w_ref, o_ref):
    # XW = X @ W (feature transform). bf16 inputs, f32 MXU accumulation, bf16 out.
    o_ref[...] = jnp.dot(
        x_ref[...], w_ref[...], preferred_element_type=jnp.float32
    ).astype(o_ref.dtype)


def _aggregate_full_kernel(a_ref, xw_ref, b_ref, o_ref):
    # One (tm, N_pad) row stripe of A_hat times fully VMEM-resident XW:
    #   out = relu(A @ XW + b), single MXU dot, no reduction axis.
    acc = jnp.dot(a_ref[...], xw_ref[...], preferred_element_type=jnp.float32)
    # NOTE: padded rows (>= n) end up holding relu(bias); harmless — A_hat's padded
    # columns are zero so they never leak into valid rows, and only [:n] is read back.
    o_ref[...] = jnp.maximum(acc + b_ref[...], 0.0).astype(o_ref.dtype)


def _aggregate_tiled_kernel(a_ref, xw_ref, b_ref, o_ref, acc_ref):
    # Fallback for huge N: out = relu(A_hat @ XW + b), reduction over k tiles into an
    # f32 VMEM accumulator; bias + ReLU only in the k==last finalize branch.
    k = pl.program_id(1)

    @pl.when(k == 0)
    def _():
        acc_ref[...] = jnp.zeros_like(acc_ref)

    acc_ref[...] += jnp.dot(
        a_ref[...], xw_ref[...], preferred_element_type=jnp.float32
    )

    @pl.when(k == pl.num_programs(1) - 1)
    def _():
        out = acc_ref[...] + b_ref[...]  # (1, F_out_pad) broadcast
        o_ref[...] = jnp.maximum(out, 0.0).astype(o_ref.dtype)


# ----------------------------- pallas_call wrappers ----------------------------------


def _feat_transform(h_pad, w_pad, tr, vmem_limit):
    """XW = h_pad @ w_pad, tiled over node rows; W stays resident."""
    n_pad, f_in_pad = h_pad.shape
    f_out_pad = w_pad.shape[1]
    return pl.pallas_call(
        _feat_transform_kernel,
        out_shape=jax.ShapeDtypeStruct((n_pad, f_out_pad), jnp.bfloat16),
        grid=(n_pad // tr,),
        in_specs=[
            pl.BlockSpec((tr, f_in_pad), lambda i: (i, 0)),         # X row tile
            pl.BlockSpec((f_in_pad, f_out_pad), lambda i: (0, 0)),  # W (resident)
        ],
        out_specs=pl.BlockSpec((tr, f_out_pad), lambda i: (i, 0)),
        compiler_params=pltpu.CompilerParams(
            dimension_semantics=("parallel",),
            vmem_limit_bytes=vmem_limit,
        ),
    )(h_pad, w_pad)


def _aggregate_full(a_pad, xw_pad, b_pad, tm, out_dtype, vmem_limit):
    """relu(A_hat @ XW + b) with XW fully resident; grid only over row stripes."""
    n_pad = a_pad.shape[0]
    f_out_pad = xw_pad.shape[1]
    return pl.pallas_call(
        _aggregate_full_kernel,
        out_shape=jax.ShapeDtypeStruct((n_pad, f_out_pad), out_dtype),
        grid=(n_pad // tm,),
        in_specs=[
            pl.BlockSpec((tm, n_pad), lambda i: (i, 0)),          # A_hat row stripe
            pl.BlockSpec((n_pad, f_out_pad), lambda i: (0, 0)),   # XW (resident, 1 DMA)
            pl.BlockSpec((1, f_out_pad), lambda i: (0, 0)),       # bias (resident)
        ],
        out_specs=pl.BlockSpec((tm, f_out_pad), lambda i: (i, 0)),
        compiler_params=pltpu.CompilerParams(
            dimension_semantics=("parallel",),
            vmem_limit_bytes=vmem_limit,
        ),
    )(a_pad, xw_pad, b_pad)


def _aggregate_tiled(a_pad, xw_pad, b_pad, tm, tk, out_dtype, vmem_limit):
    """relu(A_hat @ XW + b), tiled (tm rows x tk reduction) with f32 accumulator."""
    n_pad = a_pad.shape[0]
    f_out_pad = xw_pad.shape[1]
    return pl.pallas_call(
        _aggregate_tiled_kernel,
        out_shape=jax.ShapeDtypeStruct((n_pad, f_out_pad), out_dtype),
        grid=(n_pad // tm, n_pad // tk),
        in_specs=[
            pl.BlockSpec((tm, tk), lambda i, k: (i, k)),           # A_hat tile
            pl.BlockSpec((tk, f_out_pad), lambda i, k: (k, 0)),    # XW tile
            pl.BlockSpec((1, f_out_pad), lambda i, k: (0, 0)),     # bias (resident)
        ],
        out_specs=pl.BlockSpec((tm, f_out_pad), lambda i, k: (i, 0)),
        scratch_shapes=[pltpu.VMEM((tm, f_out_pad), jnp.float32)],
        compiler_params=pltpu.CompilerParams(
            dimension_semantics=("parallel", "arbitrary"),
            vmem_limit_bytes=vmem_limit,
        ),
    )(a_pad, xw_pad, b_pad)


# ----------------------------- tile planning -----------------------------------------


def _plan_aggregation(n_pad, f_out_pad, vmem_limit):
    """Pick ('full', tm, None) when XW + an A row stripe fits VMEM, else ('tiled', tm, tk)."""
    budget = _plan_budget(vmem_limit)
    # Keep >= 2 row programs whenever possible so the parallel axis can use both
    # TensorCores on v7x; cap tm at 1024.
    tm_cap = n_pad if n_pad < 256 else n_pad // 2
    tm_cap = min(tm_cap, 1024)
    cands = [t for t in range(128, max(128, min(tm_cap, n_pad)) + 1, 128)
             if n_pad % t == 0]
    for tm in sorted(cands, reverse=True):
        need = (2 * tm * n_pad * 2            # A row stripe, bf16, double buffered
                + 2 * n_pad * f_out_pad * 2   # XW resident (counted x2 for safety)
                + 2 * f_out_pad * 4           # bias
                + 2 * tm * f_out_pad * 4      # output (f32 worst case)
                + tm * f_out_pad * 4)         # f32 matmul-result headroom
        if need <= budget:
            return ("full", tm, None)
    # Huge-N fallback: tiled reduction with large tiles (~6 MiB of VMEM).
    tm = _divisor_tile(n_pad, min(512, tm_cap))
    tk = _divisor_tile(n_pad, 2048)
    return ("tiled", tm, tk)


def _choose_tr(n_pad, f_in_pad, f_out_pad, vmem_limit):
    budget = _plan_budget(vmem_limit)
    tr = 128
    for t in range(128, min(1024, n_pad) + 1, 128):
        if n_pad % t != 0:
            continue
        need = 2 * 2 * (t * f_in_pad + f_in_pad * f_out_pad + t * f_out_pad)
        if need <= budget:
            tr = t
    return tr


def gcn_layer(a_pad, h_pad, w, b, plan, vmem_limit, out_dtype):
    """One GCNConv layer on padded bf16 inputs: relu(A_hat @ (h @ w) + b)."""
    f_in, f_out = w.shape
    n_pad, f_in_pad = h_pad.shape
    assert f_in_pad == _round_up(f_in, 128)
    f_out_pad = _round_up(f_out, 128)

    w_pad = jnp.zeros((f_in_pad, f_out_pad), jnp.bfloat16)
    w_pad = w_pad.at[:f_in, :f_out].set(w.astype(jnp.bfloat16))
    b_pad = jnp.zeros((1, f_out_pad), jnp.float32)
    b_pad = b_pad.at[0, :f_out].set(b.astype(jnp.float32))

    tr = _choose_tr(n_pad, f_in_pad, f_out_pad, vmem_limit)
    xw = _feat_transform(h_pad, w_pad, tr, vmem_limit)   # [N_pad, F_out_pad] bf16

    kind, tm, tk = plan
    if kind == "full":
        return _aggregate_full(a_pad, xw, b_pad, tm, out_dtype, vmem_limit)
    return _aggregate_tiled(a_pad, xw, b_pad, tm, tk, out_dtype, vmem_limit)


# ----------------------------- plain-JAX glue ----------------------------------------


def build_norm_adj(edge_index, edge_weight, num_nodes):
    """Dense GCN-normalized adjacency matching PyG GCNConv's gcn_norm with self loops.

    deg[c] = sum of edge weights into c (plus self-loop weight 1);
    norm(s->t) = deg^-1/2[s] * w * deg^-1/2[t];  A_hat[t, s] = norm(s->t).
    """
    row = jnp.concatenate([edge_index[0], jnp.arange(num_nodes)])
    col = jnp.concatenate([edge_index[1], jnp.arange(num_nodes)])
    w = jnp.concatenate([edge_weight, jnp.ones((num_nodes,), edge_weight.dtype)])
    deg = jnp.zeros((num_nodes,), edge_weight.dtype).at[col].add(w)
    dinv = jnp.where(deg > 0, jax.lax.rsqrt(deg), 0.0)
    norm = dinv[row] * w * dinv[col]
    a = jnp.zeros((num_nodes, num_nodes), edge_weight.dtype)
    a = a.at[col, row].add(norm)   # aggregate messages from source (row) at target (col)
    return a


def graph_base_block_forward(x, a_norm, weights, biases,
                             aggrmethod="concat", dense=False):
    """GraphBaseBlock.forward:
       for each GCNConv: x = dropout(relu(gc(x, A_hat)));  then residual aggregation."""
    n, f_in = x.shape
    f_out = weights[0].shape[1]

    n_pad = _round_up(n, 128)            # decoupled from tile size (no N^2 inflation)
    f_in_pad = _round_up(f_in, 128)
    f_out_pad = _round_up(f_out, 128)

    vmem_limit = _vmem_limit_bytes()
    plan = _plan_aggregation(n_pad, f_out_pad, vmem_limit)

    # Pad + cast once (zero padding never contaminates valid rows/cols).
    a_pad = jnp.zeros((n_pad, n_pad), jnp.bfloat16)
    a_pad = a_pad.at[:n, :n].set(a_norm.astype(jnp.bfloat16))
    h_pad = jnp.zeros((n_pad, f_in_pad), jnp.bfloat16)
    h_pad = h_pad.at[:n, :f_in].set(x.astype(jnp.bfloat16))

    inp = x
    denseout = None
    f_cur = f_in
    n_layers = len(weights)
    for li, (w, b) in enumerate(zip(weights, biases)):
        if dense:
            h_valid = inp if denseout is None else h_pad[:n, :f_cur].astype(x.dtype)
            denseout = h_valid if denseout is None else jnp.concatenate(
                [denseout, h_valid], axis=1)
        out_dtype = jnp.float32 if li == n_layers - 1 else jnp.bfloat16
        h_pad = gcn_layer(a_pad, h_pad, w, b, plan, vmem_limit, out_dtype)
        f_cur = w.shape[1]
        # F.dropout(x, p, training=False) -> identity at inference (deterministic).

    h = h_pad[:n, :f_cur].astype(x.dtype)

    # TODO(synk): fuse this residual concat into the last aggregation's out_spec
    # (column-offset write) to avoid a separate XLA pass over the N x F output.
    if not dense:
        if aggrmethod == "concat":
            return jnp.concatenate([h, inp], axis=1)
        elif aggrmethod == "add":
            return h + inp
        else:  # 'nores'
            return h
    return jnp.concatenate([h, denseout], axis=1)


def _reference_forward(x, a_norm, weights, biases, aggrmethod="concat", dense=False):
    """Pure-JAX f32 reference for correctness checking."""
    h = x
    inp = x
    denseout = None
    for w, b in zip(weights, biases):
        if dense:
            denseout = h if denseout is None else jnp.concatenate([denseout, h], 1)
        h = jnp.maximum(a_norm @ (h @ w) + b, 0.0)
    if not dense:
        if aggrmethod == "concat":
            return jnp.concatenate([h, inp], 1)
        if aggrmethod == "add":
            return h + inp
        return h
    return jnp.concatenate([h, denseout], 1)


if __name__ == "__main__":
    # Small shapes consistent with the module: N nodes, in_features -> hidden per layer.
    N = 16
    in_features = 32
    out_features = 32          # hidden dim
    nbaselayer = 2
    num_edges = 40

    key = jax.random.PRNGKey(0)
    k_src, k_dst, k_w, k_x = jax.random.split(key, 4)
    src = jax.random.randint(k_src, (num_edges,), 0, N)
    dst = jax.random.randint(k_dst, (num_edges,), 0, N)
    edge_index = jnp.stack([src, dst])                                   # [2, E]
    edge_weight = jax.random.uniform(k_w, (num_edges,), jnp.float32, 0.5, 1.5)
    x = jax.random.normal(k_x, (N, in_features), jnp.float32)            # [N, in_features]

    # Deterministic parameter init (glorot-uniform weights, zero bias),
    # layer shapes per GraphBaseBlock.__makehidden:
    #   layer 0: (in_features -> out_features); layers 1..: (out_features -> out_features).
    weights, biases = [], []
    fin = in_features
    pkey = jax.random.PRNGKey(42)
    for _ in range(nbaselayer):
        pkey, sub = jax.random.split(pkey)
        scale = float(jnp.sqrt(6.0 / (fin + out_features)))
        weights.append(jax.random.uniform(sub, (fin, out_features), jnp.float32,
                                          -scale, scale))
        biases.append(jnp.zeros((out_features,), jnp.float32))
        fin = out_features

    a_norm = build_norm_adj(edge_index, edge_weight, N)                  # [N, N]

    fwd = jax.jit(graph_base_block_forward, static_argnames=("aggrmethod", "dense"))
    out = fwd(x, a_norm, weights, biases, aggrmethod="concat", dense=False)
    out = jax.block_until_ready(out)

    # aggrmethod='concat', dense=False  ->  out_features = in_features + out_features
    assert out.shape == (N, in_features + out_features), out.shape
    assert out.dtype == jnp.float32

    # Correctness vs. f32 reference (loose tolerance: MXU inputs are bf16).
    ref = _reference_forward(x, a_norm, weights, biases,
                             aggrmethod="concat", dense=False)
    assert jnp.allclose(out, ref, atol=1e-1, rtol=1e-1), float(
        jnp.max(jnp.abs(out - ref)))

    print("KERNEL_OK")
</pallas_src>

<mosaic_0001>
module attributes {stable_mosaic.version = 11 : i64} {
  func.func @_feat_transform_kernel(%arg0: i32, %arg1: memref<128x128xbf16, #tpu.memory_space<vmem>>, %arg2: memref<128x128xbf16, #tpu.memory_space<vmem>>, %arg3: memref<128x128xbf16, #tpu.memory_space<vmem>>) attributes {dimension_semantics = [#tpu.dimension_semantics<parallel>], iteration_bounds = array<i64: 1>, scalar_prefetch = 0 : i64, scratch_operands = 0 : i64, tpu.core_type = #tpu.core_type<tc>, window_params = [{transform_indices = @transform_0, window_bounds = array<i64: 128, 128>}, {pipeline_mode = #tpu.pipeline_mode<synchronous>, transform_indices = @transform_1, window_bounds = array<i64: 128, 128>}, {transform_indices = @transform_2, window_bounds = array<i64: 128, 128>}]} {
    %c0 = arith.constant 0 : index
    %c0_0 = arith.constant 0 : index
    %0 = vector.load %arg1[%c0, %c0_0] : memref<128x128xbf16, #tpu.memory_space<vmem>>, vector<128x128xbf16>
    %c0_1 = arith.constant 0 : index
    %c0_2 = arith.constant 0 : index
    %1 = vector.load %arg2[%c0_1, %c0_2] : memref<128x128xbf16, #tpu.memory_space<vmem>>, vector<128x128xbf16>
    %cst = arith.constant dense<0.000000e+00> : vector<128x128xf32>
    %2 = tpu.matmul %0, %1, %cst {dimension_numbers = #tpu.dot_dimension_numbers<[1], [0], [0], [1], [0, 0, 1, 1], [], []>} : vector<128x128xbf16>, vector<128x128xbf16>, vector<128x128xf32> -> vector<128x128xf32>
    %3 = arith.truncf %2 : vector<128x128xf32> to vector<128x128xbf16>
    %c0_3 = arith.constant 0 : index
    %c0_4 = arith.constant 0 : index
    %4 = vector.load %arg3[%c0_3, %c0_4] : memref<128x128xbf16, #tpu.memory_space<vmem>>, vector<128x128xbf16>
    tpu.vector_store %arg3[%c0_3, %c0_4], %3 {strides = array<i32>} : memref<128x128xbf16, #tpu.memory_space<vmem>>, vector<128x128xbf16>,
    return
  }
  func.func @transform_0(%arg0: i32) -> (i32, i32) {
    %c0_i32 = arith.constant 0 : i32
    %c0_i32_0 = arith.constant 0 : i32
    return %arg0, %c0_i32 : i32, i32
  }
  func.func @transform_1(%arg0: i32) -> (i32, i32) {
    %c0_i32 = arith.constant 0 : i32
    %c0_i32_0 = arith.constant 0 : i32
    %c0_i32_1 = arith.constant 0 : i32
    return %c0_i32, %c0_i32_0 : i32, i32
  }
  func.func @transform_2(%arg0: i32) -> (i32, i32) {
    %c0_i32 = arith.constant 0 : i32
    %c0_i32_0 = arith.constant 0 : i32
    return %arg0, %c0_i32 : i32, i32
  }
}

module attributes {stable_mosaic.version = 11 : i64} {
  func.func @_aggregate_full_kernel(%arg0: i32, %arg1: memref<128x128xbf16, #tpu.memory_space<vmem>>, %arg2: memref<128x128xbf16, #tpu.memory_space<vmem>>, %arg3: memref<1x128xf32, #tpu.memory_space<vmem>>, %arg4: memref<128x128xbf16, #tpu.memory_space<vmem>>) attributes {dimension_semantics = [#tpu.dimension_semantics<parallel>], iteration_bounds = array<i64: 1>, scalar_prefetch = 0 : i64, scratch_operands = 0 : i64, tpu.core_type = #tpu.core_type<tc>, window_params = [{transform_indices = @transform_0, window_bounds = array<i64: 128, 128>}, {pipeline_mode = #tpu.pipeline_mode<synchronous>, transform_indices = @transform_1, window_bounds = array<i64: 128, 128>}, {pipeline_mode = #tpu.pipeline_mode<synchronous>, transform_indices = @transform_2, window_bounds = array<i64: 1, 128>}, {transform_indices = @transform_3, window_bounds = array<i64: 128, 128>}]} {
    %c0 = arith.constant 0 : index
    %c0_0 = arith.constant 0 : index
    %0 = vector.load %arg1[%c0, %c0_0] : memref<128x128xbf16, #tpu.memory_space<vmem>>, vector<128x128xbf16>
    %c0_1 = arith.constant 0 : index
    %c0_2 = arith.constant 0 : index
    %1 = vector.load %arg2[%c0_1, %c0_2] : memref<128x128xbf16, #tpu.memory_space<vmem>>, vector<128x128xbf16>
    %cst = arith.constant dense<0.000000e+00> : vector<128x128xf32>
    %2 = tpu.matmul %0, %1, %cst {dimension_numbers = #tpu.dot_dimension_numbers<[1], [0], [0], [1], [0, 0, 1, 1], [], []>} : vector<128x128xbf16>, vector<128x128xbf16>, vector<128x128xf32> -> vector<128x128xf32>
    %c0_3 = arith.constant 0 : index
    %c0_4 = arith.constant 0 : index
    %3 = vector.load %arg3[%c0_3, %c0_4] : memref<1x128xf32, #tpu.memory_space<vmem>>, vector<1x128xf32>
    %4 = vector.broadcast %3 : vector<1x128xf32> to vector<128x128xf32>
    %5 = arith.addf %2, %4 : vector<128x128xf32>
    %cst_5 = arith.constant 0.000000e+00 : f32
    %6 = vector.broadcast %cst_5 : f32 to vector<128x128xf32>
    %7 = arith.maximumf %5, %6 : vector<128x128xf32>
    %8 = arith.truncf %7 : vector<128x128xf32> to vector<128x128xbf16>
    %c0_6 = arith.constant 0 : index
    %c0_7 = arith.constant 0 : index
    %9 = vector.load %arg4[%c0_6, %c0_7] : memref<128x128xbf16, #tpu.memory_space<vmem>>, vector<128x128xbf16>
    tpu.vector_store %arg4[%c0_6, %c0_7], %8 {strides = array<i32>} : memref<128x128xbf16, #tpu.memory_space<vmem>>, vector<128x128xbf16>,
    return
  }
  func.func @transform_0(%arg0: i32) -> (i32, i32) {
    %c0_i32 = arith.constant 0 : i32
    %c0_i32_0 = arith.constant 0 : i32
    return %arg0, %c0_i32 : i32, i32
  }
  func.func @transform_1(%arg0: i32) -> (i32, i32) {
    %c0_i32 = arith.constant 0 : i32
    %c0_i32_0 = arith.constant 0 : i32
    %c0_i32_1 = arith.constant 0 : i32
    return %c0_i32, %c0_i32_0 : i32, i32
  }
  func.func @transform_2(%arg0: i32) -> (i32, i32) {
    %c0_i32 = arith.constant 0 : i32
    %c0_i32_0 = arith.constant 0 : i32
    %c0_i32_1 = arith.constant 0 : i32
    return %c0_i32, %c0_i32_0 : i32, i32
  }
  func.func @transform_3(%arg0: i32) -> (i32, i32) {
    %c0_i32 = arith.constant 0 : i32
    %c0_i32_0 = arith.constant 0 : i32
    return %arg0, %c0_i32 : i32, i32
  }
}

module attributes {stable_mosaic.version = 11 : i64} {
  func.func @_aggregate_full_kernel(%arg0: i32, %arg1: memref<128x128xbf16, #tpu.memory_space<vmem>>, %arg2: memref<128x128xbf16, #tpu.memory_space<vmem>>, %arg3: memref<1x128xf32, #tpu.memory_space<vmem>>, %arg4: memref<128x128xf32, #tpu.memory_space<vmem>>) attributes {dimension_semantics = [#tpu.dimension_semantics<parallel>], iteration_bounds = array<i64: 1>, scalar_prefetch = 0 : i64, scratch_operands = 0 : i64, tpu.core_type = #tpu.core_type<tc>, window_params = [{transform_indices = @transform_0, window_bounds = array<i64: 128, 128>}, {pipeline_mode = #tpu.pipeline_mode<synchronous>, transform_indices = @transform_1, window_bounds = array<i64: 128, 128>}, {pipeline_mode = #tpu.pipeline_mode<synchronous>, transform_indices = @transform_2, window_bounds = array<i64: 1, 128>}, {transform_indices = @transform_3, window_bounds = array<i64: 128, 128>}]} {
    %c0 = arith.constant 0 : index
    %c0_0 = arith.constant 0 : index
    %0 = vector.load %arg1[%c0, %c0_0] : memref<128x128xbf16, #tpu.memory_space<vmem>>, vector<128x128xbf16>
    %c0_1 = arith.constant 0 : index
    %c0_2 = arith.constant 0 : index
    %1 = vector.load %arg2[%c0_1, %c0_2] : memref<128x128xbf16, #tpu.memory_space<vmem>>, vector<128x128xbf16>
    %cst = arith.constant dense<0.000000e+00> : vector<128x128xf32>
    %2 = tpu.matmul %0, %1, %cst {dimension_numbers = #tpu.dot_dimension_numbers<[1], [0], [0], [1], [0, 0, 1, 1], [], []>} : vector<128x128xbf16>, vector<128x128xbf16>, vector<128x128xf32> -> vector<128x128xf32>
    %c0_3 = arith.constant 0 : index
    %c0_4 = arith.constant 0 : index
    %3 = vector.load %arg3[%c0_3, %c0_4] : memref<1x128xf32, #tpu.memory_space<vmem>>, vector<1x128xf32>
    %4 = vector.broadcast %3 : vector<1x128xf32> to vector<128x128xf32>
    %5 = arith.addf %2, %4 : vector<128x128xf32>
    %cst_5 = arith.constant 0.000000e+00 : f32
    %6 = vector.broadcast %cst_5 : f32 to vector<128x128xf32>
    %7 = arith.maximumf %5, %6 : vector<128x128xf32>
    %c0_6 = arith.constant 0 : index
    %c0_7 = arith.constant 0 : index
    %8 = vector.load %arg4[%c0_6, %c0_7] : memref<128x128xf32, #tpu.memory_space<vmem>>, vector<128x128xf32>
    tpu.vector_store %arg4[%c0_6, %c0_7], %7 {strides = array<i32>} : memref<128x128xf32, #tpu.memory_space<vmem>>, vector<128x128xf32>,
    return
  }
  func.func @transform_0(%arg0: i32) -> (i32, i32) {
    %c0_i32 = arith.constant 0 : i32
    %c0_i32_0 = arith.constant 0 : i32
    return %arg0, %c0_i32 : i32, i32
  }
  func.func @transform_1(%arg0: i32) -> (i32, i32) {
    %c0_i32 = arith.constant 0 : i32
    %c0_i32_0 = arith.constant 0 : i32
    %c0_i32_1 = arith.constant 0 : i32
    return %c0_i32, %c0_i32_0 : i32, i32
  }
  func.func @transform_2(%arg0: i32) -> (i32, i32) {
    %c0_i32 = arith.constant 0 : i32
    %c0_i32_0 = arith.constant 0 : i32
    %c0_i32_1 = arith.constant 0 : i32
    return %c0_i32, %c0_i32_0 : i32, i32
  }
  func.func @transform_3(%arg0: i32) -> (i32, i32) {
    %c0_i32 = arith.constant 0 : i32
    %c0_i32_0 = arith.constant 0 : i32
    return %arg0, %c0_i32 : i32, i32
  }
}

</mosaic_0001>

<llo_original>
// kernel: graph_base_block_forward.5
$region0: #{graph_base_block_forward.5}
  #allocation0 [shape = 'u32[]', space=smem, size = 0x4, offset = 0x4, fixed_abs, tag = 'smem constant byte address 0x4 - core index']
  #allocation1 [shape = 'u32[144,128]{1,0:T(1,128)}', space=vmem, size = 0x12000, scoped, tag = 'internal scratch']
  %s0 = inlined_call_operand.vmem [shape: bf16[128,128], index: 0, kind: input, shape index: {}]
  %s1 = inlined_call_operand.vmem [shape: bf16[128,128], index: 1, kind: input, shape index: {}]
  %s2 = inlined_call_operand.vmem [shape: f32[1,128], index: 2, kind: input, shape index: {}]
  %s3 = inlined_call_operand.vmem [shape: bf16[128,128], index: 3, kind: output, shape index: {}]
  %s4 = sld [smem:[#allocation0]]
  $region22: #{graph_base_block_forward.5} parent=0
    _
  %s6 = ssub.s32 1, %s4
  %s7 = scalar_select 0, %s6, %s4
  // Predicated region
  $region2: #{graph_base_block_forward.5} parent=0 // pred_check
    _
  $region3: #{graph_base_block_forward.5} parent=0 // pred_check_branch
    %9 = sbr.rel (0) target = $region5
  $region4: #{graph_base_block_forward.5} parent=0 // pred_region
    _
  $region5: #{graph_base_block_forward.5} parent=0 // pred_fallthru
    _
  // Predicated region
  $region6: #{graph_base_block_forward.5} parent=0 // pred_check
    _
  $region7: #{graph_base_block_forward.5} parent=0 // pred_check_branch
    %11 = sbr.rel (0) target = $region9
  $region8: #{graph_base_block_forward.5} parent=0 // pred_region
    _
  $region9: #{graph_base_block_forward.5} parent=0 // pred_fallthru
    _
  // Predicated region
  $region10: #{graph_base_block_forward.5} parent=0 // pred_check
    _
  $region11: #{graph_base_block_forward.5} parent=0 // pred_check_branch
    %13 = sbr.rel (0) target = $region13
  $region12: #{graph_base_block_forward.5} parent=0 // pred_region
    _
  $region13: #{graph_base_block_forward.5} parent=0 // pred_fallthru
    _
  %v15 = vld [vmem:[%s0] sm:$0xf]
  %v16 = vld [vmem:[%s0 + $0x4] sm:$0xf]
  %v17 = vld [vmem:[%s0 + $0x8] sm:$0xf]
  %v18 = vld [vmem:[%s0 + $0xc] sm:$0xf]
  %v19 = vld [vmem:[%s0 + $0x10] sm:$0xf]
  %v20 = vld [vmem:[%s0 + $0x14] sm:$0xf]
  %v21 = vld [vmem:[%s0 + $0x18] sm:$0xf]
  %v22 = vld [vmem:[%s0 + $0x1c] sm:$0xf]
  %v23 = vld [vmem:[%s0 + $0x20] sm:$0xf]
  %v24 = vld [vmem:[%s0 + $0x24] sm:$0xf]
  %v25 = vld [vmem:[%s0 + $0x28] sm:$0xf]
  %v26 = vld [vmem:[%s0 + $0x2c] sm:$0xf]
  %v27 = vld [vmem:[%s0 + $0x30] sm:$0xf]
  %v28 = vld [vmem:[%s0 + $0x34] sm:$0xf]
  %v29 = vld [vmem:[%s0 + $0x38] sm:$0xf]
  %v30 = vld [vmem:[%s0 + $0x3c] sm:$0xf]
  %v31 = vld [vmem:[%s1] sm:$0xf]
  %v32 = vld [vmem:[%s1 + $0x4] sm:$0xf]
  %v33 = vld [vmem:[%s1 + $0x8] sm:$0xf]
  %v34 = vld [vmem:[%s1 + $0xc] sm:$0xf]
  %v35 = vld [vmem:[%s1 + $0x10] sm:$0xf]
  %v36 = vld [vmem:[%s1 + $0x14] sm:$0xf]
  %v37 = vld [vmem:[%s1 + $0x18] sm:$0xf]
  %v38 = vld [vmem:[%s1 + $0x1c] sm:$0xf]
  %v39 = vld [vmem:[%s1 + $0x20] sm:$0xf]
  %v40 = vld [vmem:[%s1 + $0x24] sm:$0xf]
  %v41 = vld [vmem:[%s1 + $0x28] sm:$0xf]
  %v42 = vld [vmem:[%s1 + $0x2c] sm:$0xf]
  %v43 = vld [vmem:[%s1 + $0x30] sm:$0xf]
  %v44 = vld [vmem:[%s1 + $0x34] sm:$0xf]
  %v45 = vld [vmem:[%s1 + $0x38] sm:$0xf]
  %v46 = vld [vmem:[%s1 + $0x3c] sm:$0xf]
  %v47 = vld [vmem:[%s2] sm:$0x1]
  %v49 = vlaneseq
  %v50 = vshrl.u32 %v49, 7
  %v51 = vsub.s32 0, %v50
  %v52 = vrot.slane %v47, %v51
  %v70 = vunpack.c.l.b16 %v15
  %v71 = vunpack.c.l.b16 %v16
  %v72 = vunpack.c.l.b16 %v17
  %v73 = vunpack.c.l.b16 %v18
  %v74 = vunpack.c.l.b16 %v19
  %v75 = vunpack.c.l.b16 %v20
  %v76 = vunpack.c.l.b16 %v21
  %v77 = vunpack.c.l.b16 %v22
  %v78 = vunpack.c.l.b16 %v23
  %v79 = vunpack.c.l.b16 %v24
  %v80 = vunpack.c.l.b16 %v25
  %v81 = vunpack.c.l.b16 %v26
  %v82 = vunpack.c.l.b16 %v27
  %v83 = vunpack.c.l.b16 %v28
  %v84 = vunpack.c.l.b16 %v29
  %v85 = vunpack.c.l.b16 %v30
  %v86 = vpack.c.b16 %v71, %v70
  %v87 = vpack.c.b16 %v73, %v72
  %v88 = vpack.c.b16 %v75, %v74
  %v89 = vpack.c.b16 %v77, %v76
  %v90 = vpack.c.b16 %v79, %v78
  %v91 = vpack.c.b16 %v81, %v80
  %v92 = vpack.c.b16 %v83, %v82
  %v93 = vpack.c.b16 %v85, %v84
  %v118 = vunpack.c.l.b16 %v31
  %v119 = vunpack.c.l.b16 %v32
  %v120 = vunpack.c.l.b16 %v33
  %v121 = vunpack.c.l.b16 %v34
  %v122 = vunpack.c.l.b16 %v35
  %v123 = vunpack.c.l.b16 %v36
  %v124 = vunpack.c.l.b16 %v37
  %v125 = vunpack.c.l.b16 %v38
  %v126 = vunpack.c.l.b16 %v39
  %v127 = vunpack.c.l.b16 %v40
  %v128 = vunpack.c.l.b16 %v41
  %v129 = vunpack.c.l.b16 %v42
  %v130 = vunpack.c.l.b16 %v43
  %v131 = vunpack.c.l.b16 %v44
  %v132 = vunpack.c.l.b16 %v45
  %v133 = vunpack.c.l.b16 %v46
  %v134 = vpack.c.b16 %v119, %v118
  %v135 = vpack.c.b16 %v121, %v120
  %v136 = vpack.c.b16 %v123, %v122
  %v137 = vpack.c.b16 %v125, %v124
  %v138 = vpack.c.b16 %v127, %v126
  %v139 = vpack.c.b16 %v129, %v128
  %v140 = vpack.c.b16 %v131, %v130
  %v141 = vpack.c.b16 %v133, %v132
  %150 = vmatprep.subr.bf16.mxu0 0
  %151 = vmatpush1.bf16.msra.mxu0 %v141
  %152 = vmatprep.subr.bf16.mxu0 0
  %153 = vmatpush1.bf16.msra.mxu0 %v140
  %154 = vmatprep.subr.bf16.mxu0 0
  %155 = vmatpush1.bf16.msra.mxu0 %v139
  %156 = vmatprep.subr.bf16.mxu0 0
  %157 = vmatpush1.bf16.msra.mxu0 %v138
  %158 = vmatprep.subr.bf16.mxu0 0
  %159 = vmatpush1.bf16.msra.mxu0 %v137
  %160 = vmatprep.subr.bf16.mxu0 0
  %161 = vmatpush1.bf16.msra.mxu0 %v136
  %162 = vmatprep.subr.bf16.mxu0 0
  %163 = vmatpush1.bf16.msra.mxu0 %v135
  %164 = vmatprep.subr.bf16.mxu0 0
  %165 = vmatpush1.bf16.msra.mxu0 %v134
  %166 = vmatprep.subr.bf16.mxu0 0
  %167 = vmatpush2.bf16.msra.mxu0 0
  %168 = vmatprep.subr.bf16.mxu0 0
  %169 = vmatpush2.bf16.msra.mxu0 0
  %170 = vmatprep.subr.bf16.mxu0 0
  %171 = vmatpush2.bf16.msra.mxu0 0
  %172 = vmatprep.subr.bf16.mxu0 0
  %173 = vmatpush2.bf16.msra.mxu0 0
  %174 = vmatprep.subr.bf16.mxu0 0
  %175 = vmatpush2.bf16.msra.mxu0 0
  %176 = vmatprep.subr.bf16.mxu0 0
  %177 = vmatpush2.bf16.msra.mxu0 0
  %178 = vmatprep.subr.bf16.mxu0 0
  %179 = vmatpush2.bf16.msra.mxu0 0
  %180 = vmatprep.subr.bf16.mxu0 0
  %181 = vmatpush2.bf16.msra.mxu0 0
  %182 = vmatprep.mubr.bf16.mxu0 0
  %183 = vmatmul.mubr.bf16.gmra.mxu0 %v86
  %v184 = vpop.f32.mrf.mxu0
  %v185 = vadd.f32 %v52, %v184
  %v186 = vpop.f32.mrf.mxu0
  %v187 = vpop.f32.mrf.mxu0
  %v188 = vadd.f32 %v52, %v187
  %v189 = vpop.f32.mrf.mxu0
  %190 = vmatprep.mubr.bf16.mxu0 0
  %191 = vmatmul.mubr.bf16.gmra.mxu0 %v87
  %v192 = vpop.f32.mrf.mxu0
  %v193 = vadd.f32 %v52, %v192
  %v194 = vpop.f32.mrf.mxu0
  %v195 = vpop.f32.mrf.mxu0
  %v196 = vadd.f32 %v52, %v195
  %v197 = vpop.f32.mrf.mxu0
  %198 = vmatprep.mubr.bf16.mxu0 0
  %199 = vmatmul.mubr.bf16.gmra.mxu0 %v88
  %v200 = vpop.f32.mrf.mxu0
  %v201 = vadd.f32 %v52, %v200
  %v202 = vpop.f32.mrf.mxu0
  %v203 = vpop.f32.mrf.mxu0
  %v204 = vadd.f32 %v52, %v203
  %v205 = vpop.f32.mrf.mxu0
  %206 = vmatprep.mubr.bf16.mxu0 0
  %207 = vmatmul.mubr.bf16.gmra.mxu0 %v89
  %v208 = vpop.f32.mrf.mxu0
  %v209 = vadd.f32 %v52, %v208
  %v210 = vpop.f32.mrf.mxu0
  %v211 = vpop.f32.mrf.mxu0
  %v212 = vadd.f32 %v52, %v211
  %v213 = vpop.f32.mrf.mxu0
  %214 = vmatprep.mubr.bf16.mxu0 0
  %215 = vmatmul.mubr.bf16.gmra.mxu0 %v90
  %v216 = vpop.f32.mrf.mxu0
  %v217 = vadd.f32 %v52, %v216
  %v218 = vpop.f32.mrf.mxu0
  %v219 = vpop.f32.mrf.mxu0
  %v220 = vadd.f32 %v52, %v219
  %v221 = vpop.f32.mrf.mxu0
  %222 = vmatprep.mubr.bf16.mxu0 0
  %223 = vmatmul.mubr.bf16.gmra.mxu0 %v91
  %v224 = vpop.f32.mrf.mxu0
  %v225 = vadd.f32 %v52, %v224
  %v226 = vpop.f32.mrf.mxu0
  %v227 = vpop.f32.mrf.mxu0
  %v228 = vadd.f32 %v52, %v227
  %v229 = vpop.f32.mrf.mxu0
  %230 = vmatprep.mubr.bf16.mxu0 0
  %231 = vmatmul.mubr.bf16.gmra.mxu0 %v92
  %v232 = vpop.f32.mrf.mxu0
  %v233 = vadd.f32 %v52, %v232
  %v234 = vpop.f32.mrf.mxu0
  %v235 = vpop.f32.mrf.mxu0
  %v236 = vadd.f32 %v52, %v235
  %v237 = vpop.f32.mrf.mxu0
  %238 = vmatprep.mubr.bf16.mxu0 0
  %239 = vmatmul.mubr.bf16.gmra.mxu0 %v93
  %v240 = vpop.f32.mrf.mxu0
  %v241 = vadd.f32 %v52, %v240
  %v242 = vpop.f32.mrf.mxu0
  %v243 = vpop.f32.mrf.mxu0
  %v244 = vadd.f32 %v52, %v243
  %v245 = vpop.f32.mrf.mxu0
  %246 = vdwg.mxu0
  %v247 = vmax.f32 %v185, 0.0
  %v248 = vmax.f32 %v188, 0.0
  %v249 = vmax.f32 %v193, 0.0
  %v250 = vmax.f32 %v196, 0.0
  %v251 = vmax.f32 %v201, 0.0
  %v252 = vmax.f32 %v204, 0.0
  %v253 = vmax.f32 %v209, 0.0
  %v254 = vmax.f32 %v212, 0.0
  %v255 = vmax.f32 %v217, 0.0
  %v256 = vmax.f32 %v220, 0.0
  %v257 = vmax.f32 %v225, 0.0
  %v258 = vmax.f32 %v228, 0.0
  %v259 = vmax.f32 %v233, 0.0
  %v260 = vmax.f32 %v236, 0.0
  %v261 = vmax.f32 %v241, 0.0
  %v262 = vmax.f32 %v244, 0.0
  %v263 = vpack.c.bf16 %v248, %v247
  %v264 = vpack.c.bf16 %v250, %v249
  %v265 = vpack.c.bf16 %v252, %v251
  %v266 = vpack.c.bf16 %v254, %v253
  %v267 = vpack.c.bf16 %v256, %v255
  %v268 = vpack.c.bf16 %v258, %v257
  %v269 = vpack.c.bf16 %v260, %v259
  %v270 = vpack.c.bf16 %v262, %v261
  %v279 = vunpack.c.l.b16 %v263
  %v280 = vunpack.c.h.b16 %v263
  %v281 = vunpack.c.l.b16 %v264
  %v282 = vunpack.c.h.b16 %v264
  %v283 = vunpack.c.l.b16 %v265
  %v284 = vunpack.c.h.b16 %v265
  %v285 = vunpack.c.l.b16 %v266
  %v286 = vunpack.c.h.b16 %v266
  %v287 = vunpack.c.l.b16 %v267
  %v288 = vunpack.c.h.b16 %v267
  %v289 = vunpack.c.l.b16 %v268
  %v290 = vunpack.c.h.b16 %v268
  %v291 = vunpack.c.l.b16 %v269
  %v292 = vunpack.c.h.b16 %v269
  %v293 = vunpack.c.l.b16 %v270
  %v294 = vunpack.c.h.b16 %v270
  %v295 = vpack.c.b16 %v279, %v279
  %v296 = vpack.c.b16 %v280, %v280
  %v297 = vpack.c.b16 %v281, %v281
  %v298 = vpack.c.b16 %v282, %v282
  %v299 = vpack.c.b16 %v283, %v283
  %v300 = vpack.c.b16 %v284, %v284
  %v301 = vpack.c.b16 %v285, %v285
  %v302 = vpack.c.b16 %v286, %v286
  %v303 = vpack.c.b16 %v287, %v287
  %v304 = vpack.c.b16 %v288, %v288
  %v305 = vpack.c.b16 %v289, %v289
  %v306 = vpack.c.b16 %v290, %v290
  %v307 = vpack.c.b16 %v291, %v291
  %v308 = vpack.c.b16 %v292, %v292
  %v309 = vpack.c.b16 %v293, %v293
  %v310 = vpack.c.b16 %v294, %v294
  %327 = vst [vmem:[%s3] sm:$0xf] %v295
  %328 = vst [vmem:[%s3 + $0x4] sm:$0xf] %v296
  %329 = vst [vmem:[%s3 + $0x8] sm:$0xf] %v297
  %330 = vst [vmem:[%s3 + $0xc] sm:$0xf] %v298
  %331 = vst [vmem:[%s3 + $0x10] sm:$0xf] %v299
  %332 = vst [vmem:[%s3 + $0x14] sm:$0xf] %v300
  %333 = vst [vmem:[%s3 + $0x18] sm:$0xf] %v301
  %334 = vst [vmem:[%s3 + $0x1c] sm:$0xf] %v302
  %335 = vst [vmem:[%s3 + $0x20] sm:$0xf] %v303
  %336 = vst [vmem:[%s3 + $0x24] sm:$0xf] %v304
  %337 = vst [vmem:[%s3 + $0x28] sm:$0xf] %v305
  %338 = vst [vmem:[%s3 + $0x2c] sm:$0xf] %v306
  %339 = vst [vmem:[%s3 + $0x30] sm:$0xf] %v307
  %340 = vst [vmem:[%s3 + $0x34] sm:$0xf] %v308
  %341 = vst [vmem:[%s3 + $0x38] sm:$0xf] %v309
  %342 = vst [vmem:[%s3 + $0x3c] sm:$0xf] %v310
  // Predicated region
  $region14: #{graph_base_block_forward.5} parent=0 // pred_check
    _
  $region15: #{graph_base_block_forward.5} parent=0 // pred_check_branch
    %344 = sbr.rel (0) target = $region17
  $region16: #{graph_base_block_forward.5} parent=0 // pred_region
    _
  $region17: #{graph_base_block_forward.5} parent=0 // pred_fallthru
    _
  // Predicated region
  $region18: #{graph_base_block_forward.5} parent=0 // pred_check
    _
  $region19: #{graph_base_block_forward.5} parent=0 // pred_check_branch
    %346 = sbr.rel (0) target = $region21
  $region20: #{graph_base_block_forward.5} parent=0 // pred_region
    _
  $region21: #{graph_base_block_forward.5} parent=0 // pred_fallthru
    _

// kernel: graph_base_block_forward.7
$region0: #{graph_base_block_forward.7}
  #allocation0 [shape = 'u32[]', space=smem, size = 0x4, offset = 0x4, fixed_abs, tag = 'smem constant byte address 0x4 - core index']
  #allocation1 [shape = 'u32[144,128]{1,0:T(1,128)}', space=vmem, size = 0x12000, scoped, tag = 'internal scratch']
  %s0 = inlined_call_operand.vmem [shape: bf16[128,128], index: 0, kind: input, shape index: {}]
  %s1 = inlined_call_operand.vmem [shape: bf16[128,128], index: 1, kind: input, shape index: {}]
  %s2 = inlined_call_operand.vmem [shape: f32[1,128], index: 2, kind: input, shape index: {}]
  %s3 = inlined_call_operand.vmem [shape: f32[128,128], index: 3, kind: output, shape index: {}]
  %s4 = sld [smem:[#allocation0]]
  $region22: #{graph_base_block_forward.7} parent=0
    _
  %s6 = ssub.s32 1, %s4
  %s7 = scalar_select 0, %s6, %s4
  // Predicated region
  $region2: #{graph_base_block_forward.7} parent=0 // pred_check
    _
  $region3: #{graph_base_block_forward.7} parent=0 // pred_check_branch
    %9 = sbr.rel (0) target = $region5
  $region4: #{graph_base_block_forward.7} parent=0 // pred_region
    _
  $region5: #{graph_base_block_forward.7} parent=0 // pred_fallthru
    _
  // Predicated region
  $region6: #{graph_base_block_forward.7} parent=0 // pred_check
    _
  $region7: #{graph_base_block_forward.7} parent=0 // pred_check_branch
    %11 = sbr.rel (0) target = $region9
  $region8: #{graph_base_block_forward.7} parent=0 // pred_region
    _
  $region9: #{graph_base_block_forward.7} parent=0 // pred_fallthru
    _
  // Predicated region
  $region10: #{graph_base_block_forward.7} parent=0 // pred_check
    _
  $region11: #{graph_base_block_forward.7} parent=0 // pred_check_branch
    %13 = sbr.rel (0) target = $region13
  $region12: #{graph_base_block_forward.7} parent=0 // pred_region
    _
  $region13: #{graph_base_block_forward.7} parent=0 // pred_fallthru
    _
  %v15 = vld [vmem:[%s0] sm:$0xf]
  %v16 = vld [vmem:[%s0 + $0x4] sm:$0xf]
  %v17 = vld [vmem:[%s0 + $0x8] sm:$0xf]
  %v18 = vld [vmem:[%s0 + $0xc] sm:$0xf]
  %v19 = vld [vmem:[%s0 + $0x10] sm:$0xf]
  %v20 = vld [vmem:[%s0 + $0x14] sm:$0xf]
  %v21 = vld [vmem:[%s0 + $0x18] sm:$0xf]
  %v22 = vld [vmem:[%s0 + $0x1c] sm:$0xf]
  %v23 = vld [vmem:[%s0 + $0x20] sm:$0xf]
  %v24 = vld [vmem:[%s0 + $0x24] sm:$0xf]
  %v25 = vld [vmem:[%s0 + $0x28] sm:$0xf]
  %v26 = vld [vmem:[%s0 + $0x2c] sm:$0xf]
  %v27 = vld [vmem:[%s0 + $0x30] sm:$0xf]
  %v28 = vld [vmem:[%s0 + $0x34] sm:$0xf]
  %v29 = vld [vmem:[%s0 + $0x38] sm:$0xf]
  %v30 = vld [vmem:[%s0 + $0x3c] sm:$0xf]
  %v31 = vld [vmem:[%s1] sm:$0xf]
  %v32 = vld [vmem:[%s1 + $0x4] sm:$0xf]
  %v33 = vld [vmem:[%s1 + $0x8] sm:$0xf]
  %v34 = vld [vmem:[%s1 + $0xc] sm:$0xf]
  %v35 = vld [vmem:[%s1 + $0x10] sm:$0xf]
  %v36 = vld [vmem:[%s1 + $0x14] sm:$0xf]
  %v37 = vld [vmem:[%s1 + $0x18] sm:$0xf]
  %v38 = vld [vmem:[%s1 + $0x1c] sm:$0xf]
  %v39 = vld [vmem:[%s1 + $0x20] sm:$0xf]
  %v40 = vld [vmem:[%s1 + $0x24] sm:$0xf]
  %v41 = vld [vmem:[%s1 + $0x28] sm:$0xf]
  %v42 = vld [vmem:[%s1 + $0x2c] sm:$0xf]
  %v43 = vld [vmem:[%s1 + $0x30] sm:$0xf]
  %v44 = vld [vmem:[%s1 + $0x34] sm:$0xf]
  %v45 = vld [vmem:[%s1 + $0x38] sm:$0xf]
  %v46 = vld [vmem:[%s1 + $0x3c] sm:$0xf]
  %v47 = vld [vmem:[%s2] sm:$0x1]
  %v49 = vlaneseq
  %v50 = vshrl.u32 %v49, 7
  %v51 = vsub.s32 0, %v50
  %v52 = vrot.slane %v47, %v51
  %v70 = vunpack.c.l.b16 %v15
  %v71 = vunpack.c.l.b16 %v16
  %v72 = vunpack.c.l.b16 %v17
  %v73 = vunpack.c.l.b16 %v18
  %v74 = vunpack.c.l.b16 %v19
  %v75 = vunpack.c.l.b16 %v20
  %v76 = vunpack.c.l.b16 %v21
  %v77 = vunpack.c.l.b16 %v22
  %v78 = vunpack.c.l.b16 %v23
  %v79 = vunpack.c.l.b16 %v24
  %v80 = vunpack.c.l.b16 %v25
  %v81 = vunpack.c.l.b16 %v26
  %v82 = vunpack.c.l.b16 %v27
  %v83 = vunpack.c.l.b16 %v28
  %v84 = vunpack.c.l.b16 %v29
  %v85 = vunpack.c.l.b16 %v30
  %v86 = vpack.c.b16 %v71, %v70
  %v87 = vpack.c.b16 %v73, %v72
  %v88 = vpack.c.b16 %v75, %v74
  %v89 = vpack.c.b16 %v77, %v76
  %v90 = vpack.c.b16 %v79, %v78
  %v91 = vpack.c.b16 %v81, %v80
  %v92 = vpack.c.b16 %v83, %v82
  %v93 = vpack.c.b16 %v85, %v84
  %v118 = vunpack.c.l.b16 %v31
  %v119 = vunpack.c.l.b16 %v32
  %v120 = vunpack.c.l.b16 %v33
  %v121 = vunpack.c.l.b16 %v34
  %v122 = vunpack.c.l.b16 %v35
  %v123 = vunpack.c.l.b16 %v36
  %v124 = vunpack.c.l.b16 %v37
  %v125 = vunpack.c.l.b16 %v38
  %v126 = vunpack.c.l.b16 %v39
  %v127 = vunpack.c.l.b16 %v40
  %v128 = vunpack.c.l.b16 %v41
  %v129 = vunpack.c.l.b16 %v42
  %v130 = vunpack.c.l.b16 %v43
  %v131 = vunpack.c.l.b16 %v44
  %v132 = vunpack.c.l.b16 %v45
  %v133 = vunpack.c.l.b16 %v46
  %v134 = vpack.c.b16 %v119, %v118
  %v135 = vpack.c.b16 %v121, %v120
  %v136 = vpack.c.b16 %v123, %v122
  %v137 = vpack.c.b16 %v125, %v124
  %v138 = vpack.c.b16 %v127, %v126
  %v139 = vpack.c.b16 %v129, %v128
  %v140 = vpack.c.b16 %v131, %v130
  %v141 = vpack.c.b16 %v133, %v132
  %150 = vmatprep.subr.bf16.mxu0 0
  %151 = vmatpush1.bf16.msra.mxu0 %v141
  %152 = vmatprep.subr.bf16.mxu0 0
  %153 = vmatpush1.bf16.msra.mxu0 %v140
  %154 = vmatprep.subr.bf16.mxu0 0
  %155 = vmatpush1.bf16.msra.mxu0 %v139
  %156 = vmatprep.subr.bf16.mxu0 0
  %157 = vmatpush1.bf16.msra.mxu0 %v138
  %158 = vmatprep.subr.bf16.mxu0 0
  %159 = vmatpush1.bf16.msra.mxu0 %v137
  %160 = vmatprep.subr.bf16.mxu0 0
  %161 = vmatpush1.bf16.msra.mxu0 %v136
  %162 = vmatprep.subr.bf16.mxu0 0
  %163 = vmatpush1.bf16.msra.mxu0 %v135
  %164 = vmatprep.subr.bf16.mxu0 0
  %165 = vmatpush1.bf16.msra.mxu0 %v134
  %166 = vmatprep.subr.bf16.mxu0 0
  %167 = vmatpush2.bf16.msra.mxu0 0
  %168 = vmatprep.subr.bf16.mxu0 0
  %169 = vmatpush2.bf16.msra.mxu0 0
  %170 = vmatprep.subr.bf16.mxu0 0
  %171 = vmatpush2.bf16.msra.mxu0 0
  %172 = vmatprep.subr.bf16.mxu0 0
  %173 = vmatpush2.bf16.msra.mxu0 0
  %174 = vmatprep.subr.bf16.mxu0 0
  %175 = vmatpush2.bf16.msra.mxu0 0
  %176 = vmatprep.subr.bf16.mxu0 0
  %177 = vmatpush2.bf16.msra.mxu0 0
  %178 = vmatprep.subr.bf16.mxu0 0
  %179 = vmatpush2.bf16.msra.mxu0 0
  %180 = vmatprep.subr.bf16.mxu0 0
  %181 = vmatpush2.bf16.msra.mxu0 0
  %182 = vmatprep.mubr.bf16.mxu0 0
  %183 = vmatmul.mubr.bf16.gmra.mxu0 %v86
  %v184 = vpop.f32.mrf.mxu0
  %v185 = vadd.f32 %v52, %v184
  %v186 = vpop.f32.mrf.mxu0
  %v187 = vpop.f32.mrf.mxu0
  %v188 = vadd.f32 %v52, %v187
  %v189 = vpop.f32.mrf.mxu0
  %190 = vmatprep.mubr.bf16.mxu0 0
  %191 = vmatmul.mubr.bf16.gmra.mxu0 %v87
  %v192 = vpop.f32.mrf.mxu0
  %v193 = vadd.f32 %v52, %v192
  %v194 = vpop.f32.mrf.mxu0
  %v195 = vpop.f32.mrf.mxu0
  %v196 = vadd.f32 %v52, %v195
  %v197 = vpop.f32.mrf.mxu0
  %198 = vmatprep.mubr.bf16.mxu0 0
  %199 = vmatmul.mubr.bf16.gmra.mxu0 %v88
  %v200 = vpop.f32.mrf.mxu0
  %v201 = vadd.f32 %v52, %v200
  %v202 = vpop.f32.mrf.mxu0
  %v203 = vpop.f32.mrf.mxu0
  %v204 = vadd.f32 %v52, %v203
  %v205 = vpop.f32.mrf.mxu0
  %206 = vmatprep.mubr.bf16.mxu0 0
  %207 = vmatmul.mubr.bf16.gmra.mxu0 %v89
  %v208 = vpop.f32.mrf.mxu0
  %v209 = vadd.f32 %v52, %v208
  %v210 = vpop.f32.mrf.mxu0
  %v211 = vpop.f32.mrf.mxu0
  %v212 = vadd.f32 %v52, %v211
  %v213 = vpop.f32.mrf.mxu0
  %214 = vmatprep.mubr.bf16.mxu0 0
  %215 = vmatmul.mubr.bf16.gmra.mxu0 %v90
  %v216 = vpop.f32.mrf.mxu0
  %v217 = vadd.f32 %v52, %v216
  %v218 = vpop.f32.mrf.mxu0
  %v219 = vpop.f32.mrf.mxu0
  %v220 = vadd.f32 %v52, %v219
  %v221 = vpop.f32.mrf.mxu0
  %222 = vmatprep.mubr.bf16.mxu0 0
  %223 = vmatmul.mubr.bf16.gmra.mxu0 %v91
  %v224 = vpop.f32.mrf.mxu0
  %v225 = vadd.f32 %v52, %v224
  %v226 = vpop.f32.mrf.mxu0
  %v227 = vpop.f32.mrf.mxu0
  %v228 = vadd.f32 %v52, %v227
  %v229 = vpop.f32.mrf.mxu0
  %230 = vmatprep.mubr.bf16.mxu0 0
  %231 = vmatmul.mubr.bf16.gmra.mxu0 %v92
  %v232 = vpop.f32.mrf.mxu0
  %v233 = vadd.f32 %v52, %v232
  %v234 = vpop.f32.mrf.mxu0
  %v235 = vpop.f32.mrf.mxu0
  %v236 = vadd.f32 %v52, %v235
  %v237 = vpop.f32.mrf.mxu0
  %238 = vmatprep.mubr.bf16.mxu0 0
  %239 = vmatmul.mubr.bf16.gmra.mxu0 %v93
  %v240 = vpop.f32.mrf.mxu0
  %v241 = vadd.f32 %v52, %v240
  %v242 = vpop.f32.mrf.mxu0
  %v243 = vpop.f32.mrf.mxu0
  %v244 = vadd.f32 %v52, %v243
  %v245 = vpop.f32.mrf.mxu0
  %246 = vdwg.mxu0
  %v247 = vmax.f32 %v185, 0.0
  %v248 = vmax.f32 %v188, 0.0
  %v249 = vmax.f32 %v193, 0.0
  %v250 = vmax.f32 %v196, 0.0
  %v251 = vmax.f32 %v201, 0.0
  %v252 = vmax.f32 %v204, 0.0
  %v253 = vmax.f32 %v209, 0.0
  %v254 = vmax.f32 %v212, 0.0
  %v255 = vmax.f32 %v217, 0.0
  %v256 = vmax.f32 %v220, 0.0
  %v257 = vmax.f32 %v225, 0.0
  %v258 = vmax.f32 %v228, 0.0
  %v259 = vmax.f32 %v233, 0.0
  %v260 = vmax.f32 %v236, 0.0
  %v261 = vmax.f32 %v241, 0.0
  %v262 = vmax.f32 %v244, 0.0
  %263 = vst [vmem:[%s3] sm:$0xff] %v247
  %264 = vst [vmem:[%s3 + $0x8] sm:$0xff] %v248
  %265 = vst [vmem:[%s3 + $0x10] sm:$0xff] %v249
  %266 = vst [vmem:[%s3 + $0x18] sm:$0xff] %v250
  %267 = vst [vmem:[%s3 + $0x20] sm:$0xff] %v251
  %268 = vst [vmem:[%s3 + $0x28] sm:$0xff] %v252
  %269 = vst [vmem:[%s3 + $0x30] sm:$0xff] %v253
  %270 = vst [vmem:[%s3 + $0x38] sm:$0xff] %v254
  %271 = vst [vmem:[%s3 + $0x40] sm:$0xff] %v255
  %272 = vst [vmem:[%s3 + $0x48] sm:$0xff] %v256
  %273 = vst [vmem:[%s3 + $0x50] sm:$0xff] %v257
  %274 = vst [vmem:[%s3 + $0x58] sm:$0xff] %v258
  %275 = vst [vmem:[%s3 + $0x60] sm:$0xff] %v259
  %276 = vst [vmem:[%s3 + $0x68] sm:$0xff] %v260
  %277 = vst [vmem:[%s3 + $0x70] sm:$0xff] %v261
  %278 = vst [vmem:[%s3 + $0x78] sm:$0xff] %v262
  // Predicated region
  $region14: #{graph_base_block_forward.7} parent=0 // pred_check
    _
  $region15: #{graph_base_block_forward.7} parent=0 // pred_check_branch
    %280 = sbr.rel (0) target = $region17
  $region16: #{graph_base_block_forward.7} parent=0 // pred_region
    _
  $region17: #{graph_base_block_forward.7} parent=0 // pred_fallthru
    _
  // Predicated region
  $region18: #{graph_base_block_forward.7} parent=0 // pred_check
    _
  $region19: #{graph_base_block_forward.7} parent=0 // pred_check_branch
    %282 = sbr.rel (0) target = $region21
  $region20: #{graph_base_block_forward.7} parent=0 // pred_region
    _
  $region21: #{graph_base_block_forward.7} parent=0 // pred_fallthru
    _

// kernel: graph_base_block_forward.4
$region0: #{graph_base_block_forward.4}
  #allocation0 [shape = 'u32[]', space=smem, size = 0x4, offset = 0x4, fixed_abs, tag = 'smem constant byte address 0x4 - core index']
  #allocation1 [shape = 'u32[144,128]{1,0:T(1,128)}', space=vmem, size = 0x12000, scoped, tag = 'internal scratch']
  %s0 = inlined_call_operand.vmem [shape: bf16[128,128], index: 0, kind: input, shape index: {}]
  %s1 = inlined_call_operand.vmem [shape: bf16[128,128], index: 1, kind: input, shape index: {}]
  %s2 = inlined_call_operand.vmem [shape: bf16[128,128], index: 2, kind: output, shape index: {}]
  %s3 = sld [smem:[#allocation0]]
  $region18: #{graph_base_block_forward.4} parent=0
    _
  %s5 = ssub.s32 1, %s3
  %s6 = scalar_select 0, %s5, %s3
  // Predicated region
  $region2: #{graph_base_block_forward.4} parent=0 // pred_check
    _
  $region3: #{graph_base_block_forward.4} parent=0 // pred_check_branch
    %8 = sbr.rel (0) target = $region5
  $region4: #{graph_base_block_forward.4} parent=0 // pred_region
    _
  $region5: #{graph_base_block_forward.4} parent=0 // pred_fallthru
    _
  // Predicated region
  $region6: #{graph_base_block_forward.4} parent=0 // pred_check
    _
  $region7: #{graph_base_block_forward.4} parent=0 // pred_check_branch
    %10 = sbr.rel (0) target = $region9
  $region8: #{graph_base_block_forward.4} parent=0 // pred_region
    _
  $region9: #{graph_base_block_forward.4} parent=0 // pred_fallthru
    _
  %v12 = vld [vmem:[%s0] sm:$0xf]
  %v13 = vld [vmem:[%s0 + $0x4] sm:$0xf]
  %v14 = vld [vmem:[%s0 + $0x8] sm:$0xf]
  %v15 = vld [vmem:[%s0 + $0xc] sm:$0xf]
  %v16 = vld [vmem:[%s0 + $0x10] sm:$0xf]
  %v17 = vld [vmem:[%s0 + $0x14] sm:$0xf]
  %v18 = vld [vmem:[%s0 + $0x18] sm:$0xf]
  %v19 = vld [vmem:[%s0 + $0x1c] sm:$0xf]
  %v20 = vld [vmem:[%s0 + $0x20] sm:$0xf]
  %v21 = vld [vmem:[%s0 + $0x24] sm:$0xf]
  %v22 = vld [vmem:[%s0 + $0x28] sm:$0xf]
  %v23 = vld [vmem:[%s0 + $0x2c] sm:$0xf]
  %v24 = vld [vmem:[%s0 + $0x30] sm:$0xf]
  %v25 = vld [vmem:[%s0 + $0x34] sm:$0xf]
  %v26 = vld [vmem:[%s0 + $0x38] sm:$0xf]
  %v27 = vld [vmem:[%s0 + $0x3c] sm:$0xf]
  %v28 = vld [vmem:[%s1] sm:$0xf]
  %v29 = vld [vmem:[%s1 + $0x4] sm:$0xf]
  %v30 = vld [vmem:[%s1 + $0x8] sm:$0xf]
  %v31 = vld [vmem:[%s1 + $0xc] sm:$0xf]
  %v32 = vld [vmem:[%s1 + $0x10] sm:$0xf]
  %v33 = vld [vmem:[%s1 + $0x14] sm:$0xf]
  %v34 = vld [vmem:[%s1 + $0x18] sm:$0xf]
  %v35 = vld [vmem:[%s1 + $0x1c] sm:$0xf]
  %v36 = vld [vmem:[%s1 + $0x20] sm:$0xf]
  %v37 = vld [vmem:[%s1 + $0x24] sm:$0xf]
  %v38 = vld [vmem:[%s1 + $0x28] sm:$0xf]
  %v39 = vld [vmem:[%s1 + $0x2c] sm:$0xf]
  %v40 = vld [vmem:[%s1 + $0x30] sm:$0xf]
  %v41 = vld [vmem:[%s1 + $0x34] sm:$0xf]
  %v42 = vld [vmem:[%s1 + $0x38] sm:$0xf]
  %v43 = vld [vmem:[%s1 + $0x3c] sm:$0xf]
  %v60 = vunpack.c.l.b16 %v12
  %v61 = vunpack.c.l.b16 %v13
  %v62 = vunpack.c.l.b16 %v14
  %v63 = vunpack.c.l.b16 %v15
  %v64 = vunpack.c.l.b16 %v16
  %v65 = vunpack.c.l.b16 %v17
  %v66 = vunpack.c.l.b16 %v18
  %v67 = vunpack.c.l.b16 %v19
  %v68 = vunpack.c.l.b16 %v20
  %v69 = vunpack.c.l.b16 %v21
  %v70 = vunpack.c.l.b16 %v22
  %v71 = vunpack.c.l.b16 %v23
  %v72 = vunpack.c.l.b16 %v24
  %v73 = vunpack.c.l.b16 %v25
  %v74 = vunpack.c.l.b16 %v26
  %v75 = vunpack.c.l.b16 %v27
  %v76 = vpack.c.b16 %v61, %v60
  %v77 = vpack.c.b16 %v63, %v62
  %v78 = vpack.c.b16 %v65, %v64
  %v79 = vpack.c.b16 %v67, %v66
  %v80 = vpack.c.b16 %v69, %v68
  %v81 = vpack.c.b16 %v71, %v70
  %v82 = vpack.c.b16 %v73, %v72
  %v83 = vpack.c.b16 %v75, %v74
  %v108 = vunpack.c.l.b16 %v28
  %v109 = vunpack.c.l.b16 %v29
  %v110 = vunpack.c.l.b16 %v30
  %v111 = vunpack.c.l.b16 %v31
  %v112 = vunpack.c.l.b16 %v32
  %v113 = vunpack.c.l.b16 %v33
  %v114 = vunpack.c.l.b16 %v34
  %v115 = vunpack.c.l.b16 %v35
  %v116 = vunpack.c.l.b16 %v36
  %v117 = vunpack.c.l.b16 %v37
  %v118 = vunpack.c.l.b16 %v38
  %v119 = vunpack.c.l.b16 %v39
  %v120 = vunpack.c.l.b16 %v40
  %v121 = vunpack.c.l.b16 %v41
  %v122 = vunpack.c.l.b16 %v42
  %v123 = vunpack.c.l.b16 %v43
  %v124 = vpack.c.b16 %v109, %v108
  %v125 = vpack.c.b16 %v111, %v110
  %v126 = vpack.c.b16 %v113, %v112
  %v127 = vpack.c.b16 %v115, %v114
  %v128 = vpack.c.b16 %v117, %v116
  %v129 = vpack.c.b16 %v119, %v118
  %v130 = vpack.c.b16 %v121, %v120
  %v131 = vpack.c.b16 %v123, %v122
  %140 = vmatprep.subr.bf16.mxu0 0
  %141 = vmatpush1.bf16.msra.mxu0 %v131
  %142 = vmatprep.subr.bf16.mxu0 0
  %143 = vmatpush1.bf16.msra.mxu0 %v130
  %144 = vmatprep.subr.bf16.mxu0 0
  %145 = vmatpush1.bf16.msra.mxu0 %v129
  %146 = vmatprep.subr.bf16.mxu0 0
  %147 = vmatpush1.bf16.msra.mxu0 %v128
  %148 = vmatprep.subr.bf16.mxu0 0
  %149 = vmatpush1.bf16.msra.mxu0 %v127
  %150 = vmatprep.subr.bf16.mxu0 0
  %151 = vmatpush1.bf16.msra.mxu0 %v126
  %152 = vmatprep.subr.bf16.mxu0 0
  %153 = vmatpush1.bf16.msra.mxu0 %v125
  %154 = vmatprep.subr.bf16.mxu0 0
  %155 = vmatpush1.bf16.msra.mxu0 %v124
  %156 = vmatprep.subr.bf16.mxu0 0
  %157 = vmatpush2.bf16.msra.mxu0 0
  %158 = vmatprep.subr.bf16.mxu0 0
  %159 = vmatpush2.bf16.msra.mxu0 0
  %160 = vmatprep.subr.bf16.mxu0 0
  %161 = vmatpush2.bf16.msra.mxu0 0
  %162 = vmatprep.subr.bf16.mxu0 0
  %163 = vmatpush2.bf16.msra.mxu0 0
  %164 = vmatprep.subr.bf16.mxu0 0
  %165 = vmatpush2.bf16.msra.mxu0 0
  %166 = vmatprep.subr.bf16.mxu0 0
  %167 = vmatpush2.bf16.msra.mxu0 0
  %168 = vmatprep.subr.bf16.mxu0 0
  %169 = vmatpush2.bf16.msra.mxu0 0
  %170 = vmatprep.subr.bf16.mxu0 0
  %171 = vmatpush2.bf16.msra.mxu0 0
  %172 = vmatprep.mubr.bf16.mxu0 0
  %173 = vmatmul.mubr.bf16.gmra.mxu0 %v76
  %v174 = vpop.f32.mrf.mxu0
  %v175 = vadd.f32 0.0, %v174
  %v176 = vpop.f32.mrf.mxu0
  %v177 = vpop.f32.mrf.mxu0
  %v178 = vadd.f32 0.0, %v177
  %v179 = vpop.f32.mrf.mxu0
  %180 = vmatprep.mubr.bf16.mxu0 0
  %181 = vmatmul.mubr.bf16.gmra.mxu0 %v77
  %v182 = vpop.f32.mrf.mxu0
  %v183 = vadd.f32 0.0, %v182
  %v184 = vpop.f32.mrf.mxu0
  %v185 = vpop.f32.mrf.mxu0
  %v186 = vadd.f32 0.0, %v185
  %v187 = vpop.f32.mrf.mxu0
  %188 = vmatprep.mubr.bf16.mxu0 0
  %189 = vmatmul.mubr.bf16.gmra.mxu0 %v78
  %v190 = vpop.f32.mrf.mxu0
  %v191 = vadd.f32 0.0, %v190
  %v192 = vpop.f32.mrf.mxu0
  %v193 = vpop.f32.mrf.mxu0
  %v194 = vadd.f32 0.0, %v193
  %v195 = vpop.f32.mrf.mxu0
  %196 = vmatprep.mubr.bf16.mxu0 0
  %197 = vmatmul.mubr.bf16.gmra.mxu0 %v79
  %v198 = vpop.f32.mrf.mxu0
  %v199 = vadd.f32 0.0, %v198
  %v200 = vpop.f32.mrf.mxu0
  %v201 = vpop.f32.mrf.mxu0
  %v202 = vadd.f32 0.0, %v201
  %v203 = vpop.f32.mrf.mxu0
  %204 = vmatprep.mubr.bf16.mxu0 0
  %205 = vmatmul.mubr.bf16.gmra.mxu0 %v80
  %v206 = vpop.f32.mrf.mxu0
  %v207 = vadd.f32 0.0, %v206
  %v208 = vpop.f32.mrf.mxu0
  %v209 = vpop.f32.mrf.mxu0
  %v210 = vadd.f32 0.0, %v209
  %v211 = vpop.f32.mrf.mxu0
  %212 = vmatprep.mubr.bf16.mxu0 0
  %213 = vmatmul.mubr.bf16.gmra.mxu0 %v81
  %v214 = vpop.f32.mrf.mxu0
  %v215 = vadd.f32 0.0, %v214
  %v216 = vpop.f32.mrf.mxu0
  %v217 = vpop.f32.mrf.mxu0
  %v218 = vadd.f32 0.0, %v217
  %v219 = vpop.f32.mrf.mxu0
  %220 = vmatprep.mubr.bf16.mxu0 0
  %221 = vmatmul.mubr.bf16.gmra.mxu0 %v82
  %v222 = vpop.f32.mrf.mxu0
  %v223 = vadd.f32 0.0, %v222
  %v224 = vpop.f32.mrf.mxu0
  %v225 = vpop.f32.mrf.mxu0
  %v226 = vadd.f32 0.0, %v225
  %v227 = vpop.f32.mrf.mxu0
  %228 = vmatprep.mubr.bf16.mxu0 0
  %229 = vmatmul.mubr.bf16.gmra.mxu0 %v83
  %v230 = vpop.f32.mrf.mxu0
  %v231 = vadd.f32 0.0, %v230
  %v232 = vpop.f32.mrf.mxu0
  %v233 = vpop.f32.mrf.mxu0
  %v234 = vadd.f32 0.0, %v233
  %v235 = vpop.f32.mrf.mxu0
  %236 = vdwg.mxu0
  %v237 = vpack.c.bf16 %v178, %v175
  %v238 = vpack.c.bf16 %v186, %v183
  %v239 = vpack.c.bf16 %v194, %v191
  %v240 = vpack.c.bf16 %v202, %v199
  %v241 = vpack.c.bf16 %v210, %v207
  %v242 = vpack.c.bf16 %v218, %v215
  %v243 = vpack.c.bf16 %v226, %v223
  %v244 = vpack.c.bf16 %v234, %v231
  %v253 = vunpack.c.l.b16 %v237
  %v254 = vunpack.c.h.b16 %v237
  %v255 = vunpack.c.l.b16 %v238
  %v256 = vunpack.c.h.b16 %v238
  %v257 = vunpack.c.l.b16 %v239
  %v258 = vunpack.c.h.b16 %v239
  %v259 = vunpack.c.l.b16 %v240
  %v260 = vunpack.c.h.b16 %v240
  %v261 = vunpack.c.l.b16 %v241
  %v262 = vunpack.c.h.b16 %v241
  %v263 = vunpack.c.l.b16 %v242
  %v264 = vunpack.c.h.b16 %v242
  %v265 = vunpack.c.l.b16 %v243
  %v266 = vunpack.c.h.b16 %v243
  %v267 = vunpack.c.l.b16 %v244
  %v268 = vunpack.c.h.b16 %v244
  %v269 = vpack.c.b16 %v253, %v253
  %v270 = vpack.c.b16 %v254, %v254
  %v271 = vpack.c.b16 %v255, %v255
  %v272 = vpack.c.b16 %v256, %v256
  %v273 = vpack.c.b16 %v257, %v257
  %v274 = vpack.c.b16 %v258, %v258
  %v275 = vpack.c.b16 %v259, %v259
  %v276 = vpack.c.b16 %v260, %v260
  %v277 = vpack.c.b16 %v261, %v261
  %v278 = vpack.c.b16 %v262, %v262
  %v279 = vpack.c.b16 %v263, %v263
  %v280 = vpack.c.b16 %v264, %v264
  %v281 = vpack.c.b16 %v265, %v265
  %v282 = vpack.c.b16 %v266, %v266
  %v283 = vpack.c.b16 %v267, %v267
  %v284 = vpack.c.b16 %v268, %v268
  %301 = vst [vmem:[%s2] sm:$0xf] %v269
  %302 = vst [vmem:[%s2 + $0x4] sm:$0xf] %v270
  %303 = vst [vmem:[%s2 + $0x8] sm:$0xf] %v271
  %304 = vst [vmem:[%s2 + $0xc] sm:$0xf] %v272
  %305 = vst [vmem:[%s2 + $0x10] sm:$0xf] %v273
  %306 = vst [vmem:[%s2 + $0x14] sm:$0xf] %v274
  %307 = vst [vmem:[%s2 + $0x18] sm:$0xf] %v275
  %308 = vst [vmem:[%s2 + $0x1c] sm:$0xf] %v276
  %309 = vst [vmem:[%s2 + $0x20] sm:$0xf] %v277
  %310 = vst [vmem:[%s2 + $0x24] sm:$0xf] %v278
  %311 = vst [vmem:[%s2 + $0x28] sm:$0xf] %v279
  %312 = vst [vmem:[%s2 + $0x2c] sm:$0xf] %v280
  %313 = vst [vmem:[%s2 + $0x30] sm:$0xf] %v281
  %314 = vst [vmem:[%s2 + $0x34] sm:$0xf] %v282
  %315 = vst [vmem:[%s2 + $0x38] sm:$0xf] %v283
  %316 = vst [vmem:[%s2 + $0x3c] sm:$0xf] %v284
  // Predicated region
  $region10: #{graph_base_block_forward.4} parent=0 // pred_check
    _
  $region11: #{graph_base_block_forward.4} parent=0 // pred_check_branch
    %318 = sbr.rel (0) target = $region13
  $region12: #{graph_base_block_forward.4} parent=0 // pred_region
    _
  $region13: #{graph_base_block_forward.4} parent=0 // pred_fallthru
    _
  // Predicated region
  $region14: #{graph_base_block_forward.4} parent=0 // pred_check
    _
  $region15: #{graph_base_block_forward.4} parent=0 // pred_check_branch
    %320 = sbr.rel (0) target = $region17
  $region16: #{graph_base_block_forward.4} parent=0 // pred_region
    _
  $region17: #{graph_base_block_forward.4} parent=0 // pred_fallthru
    _

</llo_original>
